<compile_context>
chip_gen: v6e
topology: v6e:2x2x1
jax: 0.10.0
libtpu: 0.0.40
codegen_flags: <defaults>
</compile_context>

<pallas_src>
import jax
import jax.numpy as jnp
from jax.experimental import pallas as pl
from jax.experimental.pallas import tpu as pltpu

LANE = 128   # TPU lane width: last dim of every tile
TM = 1024    # rows per tile -> 1024 * 128 * 4 B = 512 KiB per f32 tile


def _disc_kernel(w_ref, b_ref, x_ref, o_ref):
    # w_ref, b_ref: (1,) f32 scalars in SMEM (the 1x1 Linear weight / bias)
    # x_ref, o_ref: (tm, 128) f32 tiles in VMEM
    w = w_ref[0]
    b = b_ref[0]
    z = x_ref[...] * w + b                       # == x @ W^T + b for a 1x1 weight
    # sigmoid(z) == 0.5 * (tanh(z / 2) + 1): one transcendental per vreg,
    # no extra divide on the VALU.
    o_ref[...] = 0.5 * (jnp.tanh(0.5 * z) + 1.0)


def discriminator_f_forward(x, weight, bias):
    """x: any shape (..., 1). weight: (1, 1). bias: (1,). Returns sigmoid(x*W + b)."""
    orig_shape = x.shape
    assert orig_shape[-1] == 1, "in_features of Linear is 1"

    xf = x.reshape(-1).astype(jnp.float32)
    n = xf.shape[0]

    # Lane-dense layout: pad element count up to a multiple of 128, view as (M, 128).
    m = -(-n // LANE)                      # ceil(n / LANE)
    if m > TM:
        tm = TM
        m_pad = -(-m // TM) * TM           # pad rows so every grid step is a full tile
    else:
        tm = m                             # single block == full array dims (allowed)
        m_pad = m
    total = m_pad * LANE

    xf = jnp.pad(xf, (0, total - n))
    x2d = xf.reshape(m_pad, LANE)

    w_s = weight.reshape(1).astype(jnp.float32)
    b_s = bias.reshape(1).astype(jnp.float32)

    out = pl.pallas_call(
        _disc_kernel,
        out_shape=jax.ShapeDtypeStruct((m_pad, LANE), jnp.float32),
        grid_spec=pl.GridSpec(
            grid=(m_pad // tm,),
            in_specs=[
                pl.BlockSpec(memory_space=pltpu.MemorySpace.SMEM),   # weight scalar
                pl.BlockSpec(memory_space=pltpu.MemorySpace.SMEM),   # bias scalar
                pl.BlockSpec((tm, LANE), lambda i: (i, 0)),          # x tile
            ],
            out_specs=pl.BlockSpec((tm, LANE), lambda i: (i, 0)),
        ),
        compiler_params=pltpu.CompilerParams(
            # Row tiles are independent -> shard across both TCs on v7x;
            # neutral on v5e/v6e (single TC).
            dimension_semantics=("parallel",),
        ),
    )(w_s, b_s, x2d)

    # Drop padding and restore the original (..., 1) shape.
    return out.reshape(-1)[:n].reshape(orig_shape)


def init_params(key):
    # Mimic PyTorch nn.Linear(1, 1) default init:
    # uniform(-1/sqrt(fan_in), 1/sqrt(fan_in)) with fan_in = 1.
    kw, kb = jax.random.split(key)
    bound = 1.0
    weight = jax.random.uniform(kw, (1, 1), jnp.float32, -bound, bound)
    bias = jax.random.uniform(kb, (1,), jnp.float32, -bound, bound)
    return weight, bias


if __name__ == "__main__":
    key = jax.random.PRNGKey(0)
    kp, kx1, kx2 = jax.random.split(key, 3)
    weight, bias = init_params(kp)

    # Small input consistent with the module: batch=16, features=1.
    x_small = jax.random.normal(kx1, (16, 1), dtype=jnp.float32)
    y_small = jax.block_until_ready(discriminator_f_forward(x_small, weight, bias))
    ref_small = jax.nn.sigmoid(x_small @ weight.T + bias)
    assert y_small.shape == (16, 1)
    assert jnp.allclose(y_small, ref_small, atol=1e-5), "small-shape mismatch vs reference"

    # Extra leading dims + a ragged length that exercises lane padding.
    x_med = jax.random.normal(kx2, (3, 700, 1), dtype=jnp.float32)
    y_med = jax.block_until_ready(discriminator_f_forward(x_med, weight, bias))
    ref_med = jax.nn.sigmoid(x_med @ weight.T + bias)
    assert y_med.shape == (3, 700, 1)
    assert jnp.allclose(y_med, ref_med, atol=1e-5), "ragged-shape mismatch vs reference"

    print("KERNEL_OK")
</pallas_src>

<mosaic_0001>
module attributes {stable_mosaic.version = 11 : i64} {
  func.func @_disc_kernel(%arg0: i32, %arg1: memref<1xf32, #tpu.memory_space<smem>>, %arg2: memref<1xf32, #tpu.memory_space<smem>>, %arg3: memref<1x128xf32, #tpu.memory_space<vmem>>, %arg4: memref<1x128xf32, #tpu.memory_space<vmem>>) attributes {dimension_semantics = [#tpu.dimension_semantics<parallel>], iteration_bounds = array<i64: 1>, scalar_prefetch = 0 : i64, scratch_operands = 0 : i64, tpu.core_type = #tpu.core_type<tc>, window_params = [{transform_indices = @transform_0, window_bounds = array<i64: 1>}, {transform_indices = @transform_1, window_bounds = array<i64: 1>}, {transform_indices = @transform_2, window_bounds = array<i64: 1, 128>}, {transform_indices = @transform_3, window_bounds = array<i64: 1, 128>}]} {
    %c0 = arith.constant 0 : index
    %0 = memref.load %arg1[%c0] : memref<1xf32, #tpu.memory_space<smem>>
    %c0_0 = arith.constant 0 : index
    %1 = memref.load %arg2[%c0_0] : memref<1xf32, #tpu.memory_space<smem>>
    %c0_1 = arith.constant 0 : index
    %c0_2 = arith.constant 0 : index
    %2 = vector.load %arg3[%c0_1, %c0_2] : memref<1x128xf32, #tpu.memory_space<vmem>>, vector<1x128xf32>
    %3 = vector.broadcast %0 : f32 to vector<1x128xf32>
    %4 = arith.mulf %2, %3 : vector<1x128xf32>
    %5 = vector.broadcast %1 : f32 to vector<1x128xf32>
    %6 = arith.addf %4, %5 : vector<1x128xf32>
    %cst = arith.constant 5.000000e-01 : f32
    %7 = vector.broadcast %cst : f32 to vector<1x128xf32>
    %8 = arith.mulf %7, %6 : vector<1x128xf32>
    %9 = math.tanh %8 : vector<1x128xf32>
    %cst_3 = arith.constant 1.000000e+00 : f32
    %10 = vector.broadcast %cst_3 : f32 to vector<1x128xf32>
    %11 = arith.addf %9, %10 : vector<1x128xf32>
    %cst_4 = arith.constant 5.000000e-01 : f32
    %12 = vector.broadcast %cst_4 : f32 to vector<1x128xf32>
    %13 = arith.mulf %12, %11 : vector<1x128xf32>
    %c0_5 = arith.constant 0 : index
    %c0_6 = arith.constant 0 : index
    %14 = vector.load %arg4[%c0_5, %c0_6] : memref<1x128xf32, #tpu.memory_space<vmem>>, vector<1x128xf32>
    tpu.vector_store %arg4[%c0_5, %c0_6], %13 {strides = array<i32>} : memref<1x128xf32, #tpu.memory_space<vmem>>, vector<1x128xf32>,
    return
  }
  func.func @transform_0(%arg0: i32) -> i32 {
    %c0_i32 = arith.constant 0 : i32
    %c0_i32_0 = arith.constant 0 : i32
    return %c0_i32 : i32
  }
  func.func @transform_1(%arg0: i32) -> i32 {
    %c0_i32 = arith.constant 0 : i32
    %c0_i32_0 = arith.constant 0 : i32
    return %c0_i32 : i32
  }
  func.func @transform_2(%arg0: i32) -> (i32, i32) {
    %c0_i32 = arith.constant 0 : i32
    %c0_i32_0 = arith.constant 0 : i32
    return %arg0, %c0_i32 : i32, i32
  }
  func.func @transform_3(%arg0: i32) -> (i32, i32) {
    %c0_i32 = arith.constant 0 : i32
    %c0_i32_0 = arith.constant 0 : i32
    return %arg0, %c0_i32 : i32, i32
  }
}

</mosaic_0001>

<llo_original>
// kernel: tpu_custom_call.1
$region0: #{tpu_custom_call.1}
  #allocation0 [shape = 'u32[]', space=smem, size = 0x4, offset = 0x4, fixed_abs, tag = 'smem constant byte address 0x4 - core index']
  #allocation1 [shape = 'u32[144,128]{1,0:T(1,128)}', space=vmem, size = 0x12000, scoped, tag = 'internal scratch']
  #allocation2 [shape = 'f32[1]{0:T(128)S(6)}', space=smem, size = 0x200, scoped, tag = 'scoped memory for tpu_custom_call.1']
  #allocation3 [shape = 'f32[1]{0:T(128)S(6)}', space=smem, size = 0x200, scoped, tag = 'scoped memory for tpu_custom_call.1']
  %s0 = inlined_call_operand.<no memory space> [shape: f32[1], index: 0, kind: input, shape index: {}]
  %s1 = inlined_call_operand.<no memory space> [shape: f32[1], index: 1, kind: input, shape index: {}]
  %s2 = inlined_call_operand.vmem [shape: f32[1,128], index: 2, kind: input, shape index: {}]
  %s3 = inlined_call_operand.hbm [shape: f32[1,128], index: 3, kind: output, shape index: {}]
  %s4 = sld [smem:[#allocation0]]
  $region22: #{tpu_custom_call.1} parent=0
    _
  %s6 = ssub.s32 1, %s4
  %s7 = scalar_select 0, %s6, %s4
  %8 = sst [smem:[#allocation2]] %s0
  %9 = sst [smem:[#allocation3]] %s1
  $region1: #{tpu_custom_call.1} parent=0
    #allocation4 [shape = 'u8[512]{0}', space=vmem, size = 0x400, scoped, tag = 'output window, operand 0, single buffered']
    #allocation5 [shape = 's32[1]{0}', space=sflag, size = 0x4, scoped, tag = 'scoped memory for tpu_custom_call.1']
    %10 = vsyncpa [#allocation5], 0
    // Predicated region
    $region2: #{tpu_custom_call.1} parent=1 // pred_check
      _
    $region3: #{tpu_custom_call.1} parent=1 // pred_check_branch
      %12 = sbr.rel (0) target = $region5
    $region4: #{tpu_custom_call.1} parent=1 // pred_region
      _
    $region5: #{tpu_custom_call.1} parent=1 // pred_fallthru
      _
    // Predicated region
    $region6: #{tpu_custom_call.1} parent=1 // pred_check
      _
    $region7: #{tpu_custom_call.1} parent=1 // pred_check_branch
      %14 = sbr.rel (0) target = $region9
    $region8: #{tpu_custom_call.1} parent=1 // pred_region
      _
    $region9: #{tpu_custom_call.1} parent=1 // pred_fallthru
      _
    // Predicated region
    $region10: #{tpu_custom_call.1} parent=1 // pred_check
      _
    $region11: #{tpu_custom_call.1} parent=1 // pred_check_branch
      %16 = sbr.rel (0) target = $region13
    $region12: #{tpu_custom_call.1} parent=1 // pred_region
      _
    $region13: #{tpu_custom_call.1} parent=1 // pred_fallthru
      _
    %s17 = sld [smem:[#allocation2]]
    %s18 = sld [smem:[#allocation3]]
    %v19 = vld [vmem:[%s2] sm:$0x1]
    %v20 = vstv %s17
    %v21 = vmul.f32 %v19, %v20
    %v22 = vstv %s18
    %v23 = vadd.f32 %v21, %v22
    %v24 = vmul.f32 %v23, 0.5
    %v25 = vtanh.pop %v24
    %v26 = vadd.f32 %v25, 1.0
    %v27 = vmul.f32 %v26, 0.5
    %28 = vst [vmem:[#allocation4] sm:$0x1] %v27
    // Predicated region
    $region14: #{tpu_custom_call.1} parent=1 // pred_check
      _
    $region15: #{tpu_custom_call.1} parent=1 // pred_check_branch
      %30 = sbr.rel (0) target = $region17
    $region16: #{tpu_custom_call.1} parent=1 // pred_region
      %s32 = ssub.s32 16, 16
      %33 = vsyncadd [#allocation5], %s32
      %s35 = sshll.u32 [#allocation4], 4
      %s36 = int_to_ptr.vmem [resolvable:$true] %s35
      %38 = dma.vmem_to_hbm [thread:$0]  %s36, 16, %s3, [#allocation5]
    $region17: #{tpu_custom_call.1} parent=1 // pred_fallthru
      _
    // Predicated region
    $region18: #{tpu_custom_call.1} parent=1 // pred_check
      _
    $region19: #{tpu_custom_call.1} parent=1 // pred_check_branch
      %40 = sbr.rel (0) target = $region21
    $region20: #{tpu_custom_call.1} parent=1 // pred_region
      %41 = dma.done [#allocation5], 16
    $region21: #{tpu_custom_call.1} parent=1 // pred_fallthru
      _
    %42 = vsyncpa [#allocation5], 1

</llo_original>
